<compile_context>
chip_gen: v7x
topology: tpu7x:2x2x1
jax: 0.10.0
libtpu: 0.0.40
codegen_flags: <defaults>
</compile_context>

<pallas_src>
import jax
import jax.numpy as jnp
from jax.experimental import pallas as pl
from jax.experimental.pallas import tpu as pltpu


def net4_kernel(x_ref, cnt_ref, w_ref, b_ref, o_ref, acc_ref):
    # x_ref:   (Bt, St, pack*D) f32   streamed token tile (lane-dense)
    # cnt_ref: (Bt, 1)          f32   valid-token counts
    # w_ref:   (pack*D, n_pad)  f32   classifier weight, tiled `pack` times, lane-padded
    # b_ref:   (1, n_pad)       f32
    # o_ref:   (Bt, n_pad)      f32
    # acc_ref: (Bt, pack*D)     f32   accumulator, resident across the S axis
    s = pl.program_id(1)

    @pl.when(s == 0)
    def _init():
        acc_ref[...] = jnp.zeros_like(acc_ref)

    # torch.sum(encoder_output, dim=1): accumulate this token tile.
    acc_ref[...] += jnp.sum(x_ref[...], axis=1)

    @pl.when(s == pl.num_programs(1) - 1)
    def _finalize():
        # (Bt, pack*D) @ (pack*D, n_pad): the tiled weight folds the packed
        # copies of each channel, so this equals pooled_sum @ W_cls.T.
        raw = jnp.dot(acc_ref[...], w_ref[...],
                      preferred_element_type=jnp.float32)        # (Bt, n_pad)
        # Divide hoisted to the (Bt, n_pad) epilogue; Inf/NaN for a fully
        # padded row matches the PyTorch reference.
        inv = 1.0 / cnt_ref[...]                                  # (Bt, 1)
        o_ref[...] = raw * inv + b_ref[...]


def _largest_tile(n, cap, align):
    """Largest t with t | n, t <= cap, and (t % align == 0 or t == n)."""
    if n <= cap:
        return n
    t = (cap // align) * align
    while t >= align:
        if n % t == 0:
            return t
        t -= align
    return n


def net4_forward(input_embed, mask, w_cls, b_cls):
    B, S, D = input_embed.shape
    n_cls = w_cls.shape[1]
    b_cls = jnp.reshape(b_cls, (1, n_cls)).astype(jnp.float32)

    # --- wrapper-side layout plumbing (no hot-path compute moved out) --------
    # Pack consecutive tokens into lanes: (B, S, D) -> (B, S/pack, pack*D).
    pack = 1
    for p in (4, 2):
        if S % p == 0 and D * p <= 512:
            pack = p
            break
    Sg = S // pack
    x = input_embed.astype(jnp.float32).reshape(B, Sg, pack * D)  # contiguous view

    # Lane-dense classifier slab: tile weight `pack` times, pad classes to 128.
    n_pad = ((n_cls + 127) // 128) * 128
    w_tiled = jnp.tile(w_cls.astype(jnp.float32), (pack, 1))      # (pack*D, n_cls)
    w_padded = jnp.zeros((pack * D, n_pad), jnp.float32).at[:, :n_cls].set(w_tiled)
    b_padded = jnp.zeros((1, n_pad), jnp.float32).at[:, :n_cls].set(b_cls)

    # torch.sum(torch.eq(mask, 0), dim=-1, keepdim=True), as f32.
    count = jnp.sum(mask == 0, axis=-1, keepdims=True).astype(jnp.float32)

    # --- tile sizing (sized against the smallest-VMEM generation, v7x) -------
    bt = _largest_tile(B, 256, 8)
    row_bytes = bt * pack * D * 4
    budget_rows = max(8, (4 * 1024 * 1024) // row_bytes)  # ~4 MiB x-tile target
    st = _largest_tile(Sg, budget_rows, 8)
    grid = (B // bt, Sg // st)

    out = pl.pallas_call(
        net4_kernel,
        out_shape=jax.ShapeDtypeStruct((B, n_pad), jnp.float32),
        grid_spec=pltpu.PrefetchScalarGridSpec(
            num_scalar_prefetch=0,
            grid=grid,
            in_specs=[
                pl.BlockSpec((bt, st, pack * D), lambda i, s: (i, s, 0)),  # x
                pl.BlockSpec((bt, 1),            lambda i, s: (i, 0)),     # count
                pl.BlockSpec((pack * D, n_pad),  lambda i, s: (0, 0)),     # W
                pl.BlockSpec((1, n_pad),         lambda i, s: (0, 0)),     # b
            ],
            out_specs=pl.BlockSpec((bt, n_pad), lambda i, s: (i, 0)),
            scratch_shapes=[pltpu.VMEM((bt, pack * D), jnp.float32)],
        ),
        compiler_params=pltpu.CompilerParams(
            dimension_semantics=("parallel", "arbitrary"),
            vmem_limit_bytes=32 * 1024 * 1024,
        ),
    )(x, count, w_padded, b_padded)

    return out[:, :n_cls]


if __name__ == "__main__":
    # Small shapes consistent with the module: embed_dim=32, head_num=4.
    B, S, D = 2, 8, 32
    NUM_CLASSES = 4

    key = jax.random.PRNGKey(0)
    kx, kw, kb = jax.random.split(key, 3)

    x = jax.random.normal(kx, (B, S, D), dtype=jnp.float32)
    # mask: 0 = valid token, 1 = padded (different valid lengths per batch row).
    valid_len = jnp.array([6, 8], dtype=jnp.int32)
    mask = (jnp.arange(S)[None, :] >= valid_len[:, None]).astype(jnp.int32)

    # nn.Linear(embed_dim, 4) parameters, weight stored pre-transposed as (D, 4).
    bound = 1.0 / jnp.sqrt(D)
    w_cls = jax.random.uniform(kw, (D, NUM_CLASSES), minval=-bound, maxval=bound,
                               dtype=jnp.float32)
    b_cls = jax.random.uniform(kb, (1, NUM_CLASSES), minval=-bound, maxval=bound,
                               dtype=jnp.float32)

    # TODO(synk): the 4 Encoder layers (attention/layernorm/FFN) are dead code in
    # the reference forward (their output is overwritten by `encoder_output =
    # input_embed`), so their parameters are intentionally not instantiated.

    out = jax.block_until_ready(net4_forward(x, mask, w_cls, b_cls))

    # Pure-JAX reference check.
    pooled = jnp.sum(x, axis=1) / jnp.sum((mask == 0).astype(jnp.float32),
                                          axis=-1, keepdims=True)
    ref = pooled @ w_cls + b_cls
    assert out.shape == (B, NUM_CLASSES)
    assert jnp.allclose(out, ref, atol=1e-5, rtol=1e-5), (out, ref)

    print("KERNEL_OK")
</pallas_src>

<mosaic_0001>
module attributes {stable_mosaic.version = 11 : i64} {
  func.func @net4_kernel(%arg0: i32, %arg1: i32, %arg2: memref<2x2x128xf32, #tpu.memory_space<vmem>>, %arg3: memref<2x1xf32, #tpu.memory_space<vmem>>, %arg4: memref<128x128xf32, #tpu.memory_space<vmem>>, %arg5: memref<1x128xf32, #tpu.memory_space<vmem>>, %arg6: memref<2x128xf32, #tpu.memory_space<vmem>>, %arg7: memref<2x128xf32, #tpu.memory_space<vmem>>) attributes {dimension_semantics = [#tpu.dimension_semantics<parallel>, #tpu.dimension_semantics<arbitrary>], iteration_bounds = array<i64: 1, 1>, scalar_prefetch = 0 : i64, scratch_operands = 1 : i64, tpu.core_type = #tpu.core_type<tc>, window_params = [{transform_indices = @transform_0, window_bounds = array<i64: 2, 2, 128>}, {transform_indices = @transform_1, window_bounds = array<i64: 2, 1>}, {pipeline_mode = #tpu.pipeline_mode<synchronous>, transform_indices = @transform_2, window_bounds = array<i64: 128, 128>}, {pipeline_mode = #tpu.pipeline_mode<synchronous>, transform_indices = @transform_3, window_bounds = array<i64: 1, 128>}, {transform_indices = @transform_4, window_bounds = array<i64: 2, 128>}]} {
    %c0_i32 = arith.constant 0 : i32
    %0 = arith.cmpi eq, %arg1, %c0_i32 : i32
    %1 = arith.extui %0 : i1 to i32
    %c0_i32_0 = arith.constant 0 : i32
    %2 = arith.cmpi ne, %1, %c0_i32_0 : i32
    scf.if %2 {
      %cst_9 = arith.constant 0.000000e+00 : f32
      %11 = vector.broadcast %cst_9 : f32 to vector<2x128xf32>
      %c0_10 = arith.constant 0 : index
      %c0_11 = arith.constant 0 : index
      %12 = vector.load %arg7[%c0_10, %c0_11] : memref<2x128xf32, #tpu.memory_space<vmem>>, vector<2x128xf32>
      tpu.vector_store %arg7[%c0_10, %c0_11], %11 {strides = array<i32>} : memref<2x128xf32, #tpu.memory_space<vmem>>, vector<2x128xf32>,
    } else {
    }
    %c0 = arith.constant 0 : index
    %c0_1 = arith.constant 0 : index
    %3 = vector.load %arg7[%c0, %c0_1] : memref<2x128xf32, #tpu.memory_space<vmem>>, vector<2x128xf32>
    %c0_2 = arith.constant 0 : index
    %c0_3 = arith.constant 0 : index
    %c0_4 = arith.constant 0 : index
    %4 = vector.load %arg2[%c0_2, %c0_3, %c0_4] : memref<2x2x128xf32, #tpu.memory_space<vmem>>, vector<2x2x128xf32>
    %cst = arith.constant dense<0.000000e+00> : vector<2x128xf32>
    %5 = vector.multi_reduction <add>, %4, %cst [1] : vector<2x2x128xf32> to vector<2x128xf32>
    %6 = arith.addf %3, %5 : vector<2x128xf32>
    %c0_5 = arith.constant 0 : index
    %c0_6 = arith.constant 0 : index
    %7 = vector.load %arg7[%c0_5, %c0_6] : memref<2x128xf32, #tpu.memory_space<vmem>>, vector<2x128xf32>
    tpu.vector_store %arg7[%c0_5, %c0_6], %6 {strides = array<i32>} : memref<2x128xf32, #tpu.memory_space<vmem>>, vector<2x128xf32>,
    %c0_i32_7 = arith.constant 0 : i32
    %8 = arith.cmpi eq, %arg1, %c0_i32_7 : i32
    %9 = arith.extui %8 : i1 to i32
    %c0_i32_8 = arith.constant 0 : i32
    %10 = arith.cmpi ne, %9, %c0_i32_8 : i32
    scf.if %10 {
      %c0_9 = arith.constant 0 : index
      %c0_10 = arith.constant 0 : index
      %11 = vector.load %arg7[%c0_9, %c0_10] : memref<2x128xf32, #tpu.memory_space<vmem>>, vector<2x128xf32>
      %c0_11 = arith.constant 0 : index
      %c0_12 = arith.constant 0 : index
      %12 = vector.load %arg4[%c0_11, %c0_12] : memref<128x128xf32, #tpu.memory_space<vmem>>, vector<128x128xf32>
      %cst_13 = arith.constant dense<0.000000e+00> : vector<2x128xf32>
      %13 = tpu.matmul %11, %12, %cst_13 {dimension_numbers = #tpu.dot_dimension_numbers<[1], [0], [0], [1], [0, 0, 1, 1], [], []>} : vector<2x128xf32>, vector<128x128xf32>, vector<2x128xf32> -> vector<2x128xf32>
      %c0_14 = arith.constant 0 : index
      %c0_15 = arith.constant 0 : index
      %14 = vector.load %arg3[%c0_14, %c0_15] : memref<2x1xf32, #tpu.memory_space<vmem>>, vector<2x1xf32>
      %cst_16 = arith.constant 1.000000e+00 : f32
      %15 = vector.broadcast %cst_16 : f32 to vector<2x1xf32>
      %16 = arith.divf %15, %14 : vector<2x1xf32>
      %17 = vector.broadcast %16 : vector<2x1xf32> to vector<2x128xf32>
      %18 = arith.mulf %13, %17 : vector<2x128xf32>
      %c0_17 = arith.constant 0 : index
      %c0_18 = arith.constant 0 : index
      %19 = vector.load %arg5[%c0_17, %c0_18] : memref<1x128xf32, #tpu.memory_space<vmem>>, vector<1x128xf32>
      %20 = vector.broadcast %19 : vector<1x128xf32> to vector<2x128xf32>
      %21 = arith.addf %18, %20 : vector<2x128xf32>
      %c0_19 = arith.constant 0 : index
      %c0_20 = arith.constant 0 : index
      %22 = vector.load %arg6[%c0_19, %c0_20] : memref<2x128xf32, #tpu.memory_space<vmem>>, vector<2x128xf32>
      tpu.vector_store %arg6[%c0_19, %c0_20], %21 {strides = array<i32>} : memref<2x128xf32, #tpu.memory_space<vmem>>, vector<2x128xf32>,
    } else {
    }
    return
  }
  func.func @transform_0(%arg0: i32, %arg1: i32) -> (i32, i32, i32) {
    %c0_i32 = arith.constant 0 : i32
    %c0_i32_0 = arith.constant 0 : i32
    return %arg0, %arg1, %c0_i32 : i32, i32, i32
  }
  func.func @transform_1(%arg0: i32, %arg1: i32) -> (i32, i32) {
    %c0_i32 = arith.constant 0 : i32
    %c0_i32_0 = arith.constant 0 : i32
    return %arg0, %c0_i32 : i32, i32
  }
  func.func @transform_2(%arg0: i32, %arg1: i32) -> (i32, i32) {
    %c0_i32 = arith.constant 0 : i32
    %c0_i32_0 = arith.constant 0 : i32
    %c0_i32_1 = arith.constant 0 : i32
    return %c0_i32, %c0_i32_0 : i32, i32
  }
  func.func @transform_3(%arg0: i32, %arg1: i32) -> (i32, i32) {
    %c0_i32 = arith.constant 0 : i32
    %c0_i32_0 = arith.constant 0 : i32
    %c0_i32_1 = arith.constant 0 : i32
    return %c0_i32, %c0_i32_0 : i32, i32
  }
  func.func @transform_4(%arg0: i32, %arg1: i32) -> (i32, i32) {
    %c0_i32 = arith.constant 0 : i32
    %c0_i32_0 = arith.constant 0 : i32
    return %arg0, %c0_i32 : i32, i32
  }
}

</mosaic_0001>

<llo_original>
// kernel: tpu_custom_call.1
$region0: #{tpu_custom_call.1}
  #allocation0 [shape = 'u32[]', space=smem, size = 0x4, offset = 0x4, fixed_abs, tag = 'smem constant byte address 0x4 - core index']
  #allocation1 [shape = 'u32[144,128]{1,0:T(1,128)}', space=vmem, size = 0x12000, scoped, tag = 'internal scratch']
  #allocation2 [shape = 'f32[2,128]{1,0:T(2,128)}', space=vmem, size = 0x400, scoped, tag = 'scratch operand']
  %s0 = inlined_call_operand.hbm [shape: f32[2,2,128], index: 0, kind: input, shape index: {}]
  %s1 = inlined_call_operand.vmem [shape: f32[2,1], index: 1, kind: input, shape index: {}]
  %s2 = inlined_call_operand.hbm [shape: f32[128,128], index: 2, kind: input, shape index: {}]
  %s3 = inlined_call_operand.vmem [shape: f32[1,128], index: 3, kind: input, shape index: {}]
  %s4 = inlined_call_operand.hbm [shape: f32[2,128], index: 4, kind: output, shape index: {}]
  %s5 = sld [smem:[#allocation0]]
  $region42: #{tpu_custom_call.1} parent=0
    _
  %s7 = ssub.s32 1, %s5
  %s8 = scalar_select 0, %s7, %s5
  $region1: #{tpu_custom_call.1} parent=0
    #allocation3 [shape = 'u8[2048]{0}', space=vmem, size = 0x800, scoped, tag = 'input window, operand 0, single buffered']
    #allocation4 [shape = 's32[1]{0}', space=sflag, size = 0x4, scoped, tag = 'scoped memory for tpu_custom_call.1']
    #allocation5 [shape = 's32[1]{0}', space=sflag, size = 0x4, scoped, tag = 'scoped memory for tpu_custom_call.1']
    #allocation6 [shape = 'u8[65536]{0}', space=vmem, size = 0x10000, scoped, tag = 'input window, operand 2, single buffered']
    #allocation7 [shape = 's32[1]{0}', space=sflag, size = 0x4, scoped, tag = 'scoped memory for tpu_custom_call.1']
    #allocation8 [shape = 'u8[1024]{0}', space=vmem, size = 0x400, scoped, tag = 'output window, operand 0, single buffered']
    %9 = vsyncpa [#allocation4], 0
    %10 = vsyncpa [#allocation7], 0
    %11 = vsyncpa [#allocation5], 0
    // Predicated region
    $region2: #{tpu_custom_call.1} parent=1 // pred_check
      _
    $region3: #{tpu_custom_call.1} parent=1 // pred_check_branch
      %13 = sbr.rel (0) target = $region5
    $region4: #{tpu_custom_call.1} parent=1 // pred_region
      %s15 = ssub.s32 64, 64
      %16 = vsyncadd [#allocation4], %s15
      %s17 = sshll.u32 [#allocation3], 4
      %s18 = int_to_ptr.vmem [resolvable:$true] %s17
      %23 = dma.hbm_to_vmem [thread:$0]  %s0, 64, %s18, [#allocation4], 32, 32, 2
    $region5: #{tpu_custom_call.1} parent=1 // pred_fallthru
      _
    // Predicated region
    $region6: #{tpu_custom_call.1} parent=1 // pred_check
      _
    $region7: #{tpu_custom_call.1} parent=1 // pred_check_branch
      %25 = sbr.rel (0) target = $region9
    $region8: #{tpu_custom_call.1} parent=1 // pred_region
      _
    $region9: #{tpu_custom_call.1} parent=1 // pred_fallthru
      _
    // Predicated region
    $region10: #{tpu_custom_call.1} parent=1 // pred_check
      _
    $region11: #{tpu_custom_call.1} parent=1 // pred_check_branch
      %27 = sbr.rel (0) target = $region13
    $region12: #{tpu_custom_call.1} parent=1 // pred_region
      %s29 = ssub.s32 2048, 2048
      %30 = vsyncadd [#allocation7], %s29
      %s31 = sshll.u32 [#allocation6], 4
      %s32 = int_to_ptr.vmem [resolvable:$true] %s31
      %37 = dma.hbm_to_vmem [thread:$0]  %s2, 2048, %s32, [#allocation7], 128, 128, 8
    $region13: #{tpu_custom_call.1} parent=1 // pred_fallthru
      _
    // Predicated region
    $region14: #{tpu_custom_call.1} parent=1 // pred_check
      _
    $region15: #{tpu_custom_call.1} parent=1 // pred_check_branch
      %39 = sbr.rel (0) target = $region17
    $region16: #{tpu_custom_call.1} parent=1 // pred_region
      _
    $region17: #{tpu_custom_call.1} parent=1 // pred_fallthru
      _
    // Predicated region
    $region18: #{tpu_custom_call.1} parent=1 // pred_check
      _
    $region19: #{tpu_custom_call.1} parent=1 // pred_check_branch
      %41 = sbr.rel (0) target = $region21
    $region20: #{tpu_custom_call.1} parent=1 // pred_region
      %42 = dma.done [#allocation4], 64
    $region21: #{tpu_custom_call.1} parent=1 // pred_fallthru
      _
    // Predicated region
    $region22: #{tpu_custom_call.1} parent=1 // pred_check
      _
    $region23: #{tpu_custom_call.1} parent=1 // pred_check_branch
      %44 = sbr.rel (0) target = $region25
    $region24: #{tpu_custom_call.1} parent=1 // pred_region
      %45 = dma.done [#allocation7], 2048
    $region25: #{tpu_custom_call.1} parent=1 // pred_fallthru
      _
    %p46 = scmp.eq.s32.totalorder 0, 0
    // Predicated region
    $region26: #{tpu_custom_call.1} parent=1 // pred_check
      %p47 = pneg %p46
    $region27: #{tpu_custom_call.1} parent=1 // pred_check_branch
      %49 = sbr.rel (%p47) target = $region29
    $region28: #{tpu_custom_call.1} parent=1 // pred_region
      %50 = vst [vmem:[#allocation2] sm:$0x3] 0.0
    $region29: #{tpu_custom_call.1} parent=1 // pred_fallthru
      _
    %v51 = vld [vmem:[#allocation2] sm:$0x3]
    %v52 = vld [vmem:[#allocation3] sm:$0x3]
    %v53 = vld [vmem:[#allocation3 + $0x2] sm:$0x3]
    %vm54 = vcmask 1041408
    %v55 = vsel %vm54, %v52, 0.0
    %v56 = vrot.slane %v55, 4
    %v57 = vadd.f32 %v55, %v56
    %v58 = vrot.slane %v57, 2
    %v59 = vadd.f32 %v57, %v58
    %v60 = vrot.slane %v59, 1
    %v61 = vadd.f32 %v59, %v60
    %v62 = vsel %vm54, %v53, 0.0
    %v63 = vrot.slane %v62, 4
    %v64 = vadd.f32 %v62, %v63
    %v65 = vrot.slane %v64, 2
    %v66 = vadd.f32 %v64, %v65
    %v67 = vrot.slane %v66, 1
    %v68 = vadd.f32 %v66, %v67
    %vm71 = vcmask 1041409
    %v72 = vsel %vm71, %v68, %v61
    %v74 = vadd.f32 %v51, %v72
    %75 = vst [vmem:[#allocation2] sm:$0x3] %v74
    // Predicated region
    $region30: #{tpu_custom_call.1} parent=1 // pred_check
      %p76 = pneg %p46
    $region31: #{tpu_custom_call.1} parent=1 // pred_check_branch
      %78 = sbr.rel (%p76) target = $region33
    $region32: #{tpu_custom_call.1} parent=1 // pred_region
      %v79 = vld [vmem:[#allocation2] sm:$0x3]
      %v80 = vld [vmem:[#allocation6] sm:$0xff]
      %v81 = vld [vmem:[#allocation6 + $0x8] sm:$0xff]
      %v82 = vld [vmem:[#allocation6 + $0x10] sm:$0xff]
      %v83 = vld [vmem:[#allocation6 + $0x18] sm:$0xff]
      %v84 = vld [vmem:[#allocation6 + $0x20] sm:$0xff]
      %v85 = vld [vmem:[#allocation6 + $0x28] sm:$0xff]
      %v86 = vld [vmem:[#allocation6 + $0x30] sm:$0xff]
      %v87 = vld [vmem:[#allocation6 + $0x38] sm:$0xff]
      %v88 = vld [vmem:[#allocation6 + $0x40] sm:$0xff]
      %v89 = vld [vmem:[#allocation6 + $0x48] sm:$0xff]
      %v90 = vld [vmem:[#allocation6 + $0x50] sm:$0xff]
      %v91 = vld [vmem:[#allocation6 + $0x58] sm:$0xff]
      %v92 = vld [vmem:[#allocation6 + $0x60] sm:$0xff]
      %v93 = vld [vmem:[#allocation6 + $0x68] sm:$0xff]
      %v94 = vld [vmem:[#allocation6 + $0x70] sm:$0xff]
      %v95 = vld [vmem:[#allocation6 + $0x78] sm:$0xff]
      %96 = vmatprep.subr.mxu0 0.0
      %97 = vmatpush1.msra.mxu0 %v80
      %98 = vmatprep.subr.mxu0 0.0
      %99 = vmatpush1.msra.mxu0 %v81
      %100 = vmatprep.subr.mxu0 0.0
      %101 = vmatpush1.msra.mxu0 %v82
      %102 = vmatprep.subr.mxu0 0.0
      %103 = vmatpush1.msra.mxu0 %v83
      %104 = vmatprep.subr.mxu0 0.0
      %105 = vmatpush1.msra.mxu0 %v84
      %106 = vmatprep.subr.mxu0 0.0
      %107 = vmatpush1.msra.mxu0 %v85
      %108 = vmatprep.subr.mxu0 0.0
      %109 = vmatpush1.msra.mxu0 %v86
      %110 = vmatprep.subr.mxu0 0.0
      %111 = vmatpush1.msra.mxu0 %v87
      %112 = vmatprep.subr.mxu0 0.0
      %113 = vmatpush1.msra.mxu0 %v88
      %114 = vmatprep.subr.mxu0 0.0
      %115 = vmatpush1.msra.mxu0 %v89
      %116 = vmatprep.subr.mxu0 0.0
      %117 = vmatpush1.msra.mxu0 %v90
      %118 = vmatprep.subr.mxu0 0.0
      %119 = vmatpush1.msra.mxu0 %v91
      %120 = vmatprep.subr.mxu0 0.0
      %121 = vmatpush1.msra.mxu0 %v92
      %122 = vmatprep.subr.mxu0 0.0
      %123 = vmatpush1.msra.mxu0 %v93
      %124 = vmatprep.subr.mxu0 0.0
      %125 = vmatpush1.msra.mxu0 %v94
      %126 = vmatprep.subr.mxu0 0.0
      %127 = vmatpush1.msra.mxu0 %v95
      %128 = vmatprep.subr.mxu0 0.0
      %129 = vmatpush1.msra.mxu0 0.0
      %130 = vmatprep.subr.mxu0 0.0
      %131 = vmatpush1.msra.mxu0 0.0
      %132 = vmatprep.subr.mxu0 0.0
      %133 = vmatpush1.msra.mxu0 0.0
      %134 = vmatprep.subr.mxu0 0.0
      %135 = vmatpush1.msra.mxu0 0.0
      %136 = vmatprep.subr.mxu0 0.0
      %137 = vmatpush1.msra.mxu0 0.0
      %138 = vmatprep.subr.mxu0 0.0
      %139 = vmatpush1.msra.mxu0 0.0
      %140 = vmatprep.subr.mxu0 0.0
      %141 = vmatpush1.msra.mxu0 0.0
      %142 = vmatprep.subr.mxu0 0.0
      %143 = vmatpush1.msra.mxu0 0.0
      %144 = vmatprep.subr.mxu0 0.0
      %145 = vmatpush1.msra.mxu0 0.0
      %146 = vmatprep.subr.mxu0 0.0
      %147 = vmatpush1.msra.mxu0 0.0
      %148 = vmatprep.subr.mxu0 0.0
      %149 = vmatpush1.msra.mxu0 0.0
      %150 = vmatprep.subr.mxu0 0.0
      %151 = vmatpush1.msra.mxu0 0.0
      %152 = vmatprep.subr.mxu0 0.0
      %153 = vmatpush1.msra.mxu0 0.0
      %154 = vmatprep.subr.mxu0 0.0
      %155 = vmatpush1.msra.mxu0 0.0
      %156 = vmatprep.subr.mxu0 0.0
      %157 = vmatpush1.msra.mxu0 0.0
      %158 = vmatprep.subr.mxu0 0.0
      %159 = vmatpush1.msra.mxu0 0.0
      %160 = vmatprep.mubr.f32.mxu0 0.0
      %161 = vmatmul.mubr.f32.gmra.mrb[0].mxu0 %v79
      %v162 = vpop.f32.mrb[0].mxu0
      %v163 = vadd.f32 0.0, %v162
      %v164 = vpop.f32.mrb[0].mxu0
      %165 = vdwg.mxu0
      %v166 = vld [vmem:[%s1] sm:$0x3]
      %v167 = vrcp.pop %v166
      %v168 = vmul.f32 1.0, %v167
      %170 = vset.pattern.permute.xlu0 0
      %171 = vperm.xlu0 %170, %v168
      %v172 = vpop.permute.xlu0 %171
      %v174 = vmul.f32 %v163, %v172
      %v175 = vld [vmem:[%s3] sm:$0x1]
      %v177 = vlaneseq
      %v178 = vshrl.u32 %v177, 7
      %v179 = vsub.s32 0, %v178
      %v180 = vrot.slane %v175, %v179
      %v182 = vadd.f32 %v174, %v180
      %183 = vst [vmem:[#allocation8] sm:$0x3] %v182
    $region33: #{tpu_custom_call.1} parent=1 // pred_fallthru
      _
    // Predicated region
    $region34: #{tpu_custom_call.1} parent=1 // pred_check
      _
    $region35: #{tpu_custom_call.1} parent=1 // pred_check_branch
      %185 = sbr.rel (0) target = $region37
    $region36: #{tpu_custom_call.1} parent=1 // pred_region
      %s187 = ssub.s32 32, 32
      %188 = vsyncadd [#allocation5], %s187
      %s190 = sshll.u32 [#allocation8], 4
      %s191 = int_to_ptr.vmem [resolvable:$true] %s190
      %193 = dma.vmem_to_hbm [thread:$0]  %s191, 32, %s4, [#allocation5]
    $region37: #{tpu_custom_call.1} parent=1 // pred_fallthru
      _
    // Predicated region
    $region38: #{tpu_custom_call.1} parent=1 // pred_check
      _
    $region39: #{tpu_custom_call.1} parent=1 // pred_check_branch
      %195 = sbr.rel (0) target = $region41
    $region40: #{tpu_custom_call.1} parent=1 // pred_region
      %196 = dma.done [#allocation5], 32
    $region41: #{tpu_custom_call.1} parent=1 // pred_fallthru
      _
    %197 = vsyncpa [#allocation4], 1
    %198 = vsyncpa [#allocation7], 1
    %199 = vsyncpa [#allocation5], 1

</llo_original>
